<compile_context>
chip_gen: v7x
topology: tpu7x:2x2x1
jax: 0.10.0
libtpu: 0.0.40
codegen_flags: <defaults>
</compile_context>

<pallas_src>
import jax
import jax.numpy as jnp
from jax.experimental import pallas as pl
from jax.experimental.pallas import tpu as pltpu


def ensemble_max_kernel(x_ref, w_ref, b_ref, o_ref):
    """Grid = (B, HW_tiles).  One fused matmul over all ensemble members.

    x_ref : (C_in, TM)        pixels-on-lanes tile of one batch element
    w_ref : (N*C_out, C_in)   all member 1x1-conv weights (VMEM-resident)
    b_ref : (N*C_out, 1)      all member biases (VMEM-resident)
    o_ref : (C_out, TM)       element-wise max over the N member outputs
    """
    c_out = o_ref.shape[0]
    n_models = w_ref.shape[0] // c_out

    # Every member's 1x1 conv at once: (N*C_out, C_in) @ (C_in, TM).
    # K = C_in is tiny; HIGHEST keeps true-f32 parity with PyTorch conv and
    # is free here (kernel is memory-bound, not MXU-bound).
    y = jnp.dot(w_ref[...], x_ref[...],
                preferred_element_type=jnp.float32,
                precision=jax.lax.Precision.HIGHEST)
    z = y + b_ref[...]  # bias for all members

    # Segment-wise max over the N member blocks, then a single ReLU
    # (relu(max(z_m)) == max(relu(z_m)) since ReLU is monotone).
    # Note: static slices at multiples of C_out are sublane-tile aligned only
    # when C_out % 8 == 0 (true here, C_out = 8); other C_out still work but
    # may incur relayout copies.
    acc = z[0:c_out, :]
    for m in range(1, n_models):
        acc = jnp.maximum(acc, z[m * c_out:(m + 1) * c_out, :])
    o_ref[...] = jnp.maximum(acc, 0.0).astype(o_ref.dtype)


def _choose_tile_m(hw, c_in, c_out, *, vmem_budget_bytes=12 << 20,
                   hard_cap=128 * 1024):
    """Pick a pixel-tile width.

    Prefers (a) the whole per-batch pixel axis if it fits the VMEM budget
    (no padding, no alignment constraint since the block equals the full dim),
    else (b) the largest multiple-of-128 divisor of hw under the cap (no
    padding copy), else (c) the cap itself (padding fallback).
    """
    per_col_bytes = (c_in + c_out) * 4 * 2  # f32, double-buffered in + out
    cap = (vmem_budget_bytes // per_col_bytes) // 128 * 128
    cap = max(512, min(hard_cap, cap))
    if hw <= cap:
        return hw
    for t in range(cap // 128, 0, -1):
        cand = t * 128
        if hw % cand == 0:
            return cand
    return cap  # ragged: wrapper pads the pixel axis


def ensemble_model_max(x_nchw, weights, biases, *, tile_m=None):
    """x_nchw:  [B, C_in, H, W]
       weights: [N, C_out, C_in]   (per-member Conv2d(C_in, C_out, 1) weights)
       biases:  [N, C_out]
       returns: [B, C_out, H, W]   element-wise max over the N member outputs
    """
    B, C_in, H, W = x_nchw.shape
    N, C_out, _ = weights.shape
    HW = H * W

    # Free layout change: NCHW -> [B, C_in, H*W] (reshape only, no transpose).
    x = x_nchw.reshape(B, C_in, HW).astype(jnp.float32)

    # Collapse the ensemble into one weight matrix / bias column.
    w_all = weights.reshape(N * C_out, C_in).astype(jnp.float32)
    b_all = biases.reshape(N * C_out, 1).astype(jnp.float32)

    if tile_m is None:
        tile_m = _choose_tile_m(HW, C_in, C_out)

    # Only pad if tile_m does not divide HW (the tile chooser avoids this
    # whenever HW has a multiple-of-128 divisor under the cap).
    HW_pad = tile_m * pl.cdiv(HW, tile_m)
    if HW_pad != HW:
        x = jnp.pad(x, ((0, 0), (0, 0), (0, HW_pad - HW)))

    out = pl.pallas_call(
        ensemble_max_kernel,
        out_shape=jax.ShapeDtypeStruct((B, C_out, HW_pad), jnp.float32),
        grid_spec=pltpu.PrefetchScalarGridSpec(
            num_scalar_prefetch=0,
            grid=(B, HW_pad // tile_m),
            in_specs=[
                pl.BlockSpec((pl.Squeezed(), C_in, tile_m),
                             lambda b, i: (b, 0, i)),
                pl.BlockSpec((N * C_out, C_in), lambda b, i: (0, 0)),  # resident
                pl.BlockSpec((N * C_out, 1), lambda b, i: (0, 0)),     # resident
            ],
            out_specs=pl.BlockSpec((pl.Squeezed(), C_out, tile_m),
                                   lambda b, i: (b, 0, i)),
        ),
        compiler_params=pltpu.CompilerParams(
            dimension_semantics=("parallel", "parallel"),
        ),
    )(x, w_all, b_all)

    if HW_pad != HW:
        out = out[:, :, :HW]
    # Free reshape back to NCHW: [B, C_out, H*W] -> [B, C_out, H, W].
    return out.reshape(B, C_out, H, W)


def reference_ensemble_max(x_nchw, weights, biases):
    """Plain-JAX reference mirroring the PyTorch ensemble-of-members semantics."""
    B, C_in, H, W = x_nchw.shape
    N, C_out, _ = weights.shape
    x_rows = jnp.transpose(x_nchw, (0, 2, 3, 1)).reshape(B * H * W, C_in)
    changeall = None
    for m in range(N):
        y = jnp.matmul(x_rows, weights[m].T,
                       precision=jax.lax.Precision.HIGHEST) + biases[m][None, :]
        y = jnp.maximum(y, 0.0)
        changeall = y if changeall is None else jnp.maximum(changeall, y)
    return changeall.reshape(B, H, W, C_out).transpose(0, 3, 1, 2)


if __name__ == "__main__":
    # Small shapes consistent with the module's forward.
    B, C_in, H, W = 2, 4, 16, 16
    C_out = 8
    N_MODELS = 3

    key = jax.random.PRNGKey(0)
    kx, kw, kb = jax.random.split(key, 3)

    x = jax.random.normal(kx, (B, C_in, H, W), dtype=jnp.float32)
    # Deterministic synthetic member parameters (Conv2d 1x1: weight [C_out, C_in]).
    weights = 0.1 * jax.random.normal(kw, (N_MODELS, C_out, C_in), dtype=jnp.float32)
    biases = 0.1 * jax.random.normal(kb, (N_MODELS, C_out), dtype=jnp.float32)

    out = ensemble_model_max(x, weights, biases)
    out = jax.block_until_ready(out)

    ref = reference_ensemble_max(x, weights, biases)
    assert out.shape == (B, C_out, H, W)
    assert jnp.allclose(out, ref, atol=1e-5, rtol=1e-5), "mismatch vs reference"

    print("KERNEL_OK")
</pallas_src>

<mosaic_0001>
module attributes {stable_mosaic.version = 11 : i64} {
  func.func @ensemble_max_kernel(%arg0: i32, %arg1: i32, %arg2: memref<1x4x256xf32, #tpu.memory_space<vmem>>, %arg3: memref<24x4xf32, #tpu.memory_space<vmem>>, %arg4: memref<24x1xf32, #tpu.memory_space<vmem>>, %arg5: memref<1x8x256xf32, #tpu.memory_space<vmem>>) attributes {dimension_semantics = [#tpu.dimension_semantics<parallel>, #tpu.dimension_semantics<parallel>], iteration_bounds = array<i64: 2, 1>, scalar_prefetch = 0 : i64, scratch_operands = 0 : i64, tpu.core_type = #tpu.core_type<tc>, window_params = [{transform_indices = @transform_0, window_bounds = array<i64: 1, 4, 256>}, {pipeline_mode = #tpu.pipeline_mode<synchronous>, transform_indices = @transform_1, window_bounds = array<i64: 24, 4>}, {pipeline_mode = #tpu.pipeline_mode<synchronous>, transform_indices = @transform_2, window_bounds = array<i64: 24, 1>}, {transform_indices = @transform_3, window_bounds = array<i64: 1, 8, 256>}]} {
    %c0 = arith.constant 0 : index
    %c0_0 = arith.constant 0 : index
    %0 = vector.load %arg3[%c0, %c0_0] : memref<24x4xf32, #tpu.memory_space<vmem>>, vector<24x4xf32>
    %c0_1 = arith.constant 0 : index
    %c0_2 = arith.constant 0 : index
    %c0_3 = arith.constant 0 : index
    %1 = vector.load %arg2[%c0_1, %c0_2, %c0_3] : memref<1x4x256xf32, #tpu.memory_space<vmem>>, vector<1x4x256xf32>
    %2 = vector.shape_cast %1 : vector<1x4x256xf32> to vector<4x256xf32>
    %cst = arith.constant dense<0.000000e+00> : vector<24x256xf32>
    %3 = tpu.matmul %0, %2, %cst {dimension_numbers = #tpu.dot_dimension_numbers<[1], [0], [0], [1], [0, 0, 1, 1], [], []>, precision = #tpu.contract_precision<fp32>} : vector<24x4xf32>, vector<4x256xf32>, vector<24x256xf32> -> vector<24x256xf32>
    %c0_4 = arith.constant 0 : index
    %c0_5 = arith.constant 0 : index
    %4 = vector.load %arg4[%c0_4, %c0_5] : memref<24x1xf32, #tpu.memory_space<vmem>>, vector<24x1xf32>
    %5 = vector.broadcast %4 : vector<24x1xf32> to vector<24x256xf32>
    %6 = arith.addf %3, %5 : vector<24x256xf32>
    %7 = vector.extract_strided_slice %6 {offsets = [0, 0], sizes = [8, 256], strides = [1, 1]} : vector<24x256xf32> to vector<8x256xf32>
    %8 = vector.extract_strided_slice %6 {offsets = [8, 0], sizes = [8, 256], strides = [1, 1]} : vector<24x256xf32> to vector<8x256xf32>
    %9 = arith.maximumf %7, %8 : vector<8x256xf32>
    %10 = vector.extract_strided_slice %6 {offsets = [16, 0], sizes = [8, 256], strides = [1, 1]} : vector<24x256xf32> to vector<8x256xf32>
    %11 = arith.maximumf %9, %10 : vector<8x256xf32>
    %cst_6 = arith.constant 0.000000e+00 : f32
    %12 = vector.broadcast %cst_6 : f32 to vector<8x256xf32>
    %13 = arith.maximumf %11, %12 : vector<8x256xf32>
    %c0_7 = arith.constant 0 : index
    %c0_8 = arith.constant 0 : index
    %c0_9 = arith.constant 0 : index
    %14 = vector.load %arg5[%c0_7, %c0_8, %c0_9] : memref<1x8x256xf32, #tpu.memory_space<vmem>>, vector<1x8x256xf32>
    %15 = vector.shape_cast %14 : vector<1x8x256xf32> to vector<8x256xf32>
    %16 = vector.shape_cast %13 : vector<8x256xf32> to vector<1x8x256xf32>
    tpu.vector_store %arg5[%c0_7, %c0_8, %c0_9], %16 {strides = array<i32>} : memref<1x8x256xf32, #tpu.memory_space<vmem>>, vector<1x8x256xf32>,
    return
  }
  func.func @transform_0(%arg0: i32, %arg1: i32) -> (i32, i32, i32) {
    %c0_i32 = arith.constant 0 : i32
    %c0_i32_0 = arith.constant 0 : i32
    return %arg0, %c0_i32, %arg1 : i32, i32, i32
  }
  func.func @transform_1(%arg0: i32, %arg1: i32) -> (i32, i32) {
    %c0_i32 = arith.constant 0 : i32
    %c0_i32_0 = arith.constant 0 : i32
    %c0_i32_1 = arith.constant 0 : i32
    return %c0_i32, %c0_i32_0 : i32, i32
  }
  func.func @transform_2(%arg0: i32, %arg1: i32) -> (i32, i32) {
    %c0_i32 = arith.constant 0 : i32
    %c0_i32_0 = arith.constant 0 : i32
    %c0_i32_1 = arith.constant 0 : i32
    return %c0_i32, %c0_i32_0 : i32, i32
  }
  func.func @transform_3(%arg0: i32, %arg1: i32) -> (i32, i32, i32) {
    %c0_i32 = arith.constant 0 : i32
    %c0_i32_0 = arith.constant 0 : i32
    return %arg0, %c0_i32, %arg1 : i32, i32, i32
  }
}

</mosaic_0001>

<llo_original>
// kernel: tpu_custom_call.1
$region0: #{tpu_custom_call.1}
  #allocation0 [shape = 'u32[]', space=smem, size = 0x4, offset = 0x4, fixed_abs, tag = 'smem constant byte address 0x4 - core index']
  #allocation1 [shape = 'u32[144,128]{1,0:T(1,128)}', space=vmem, size = 0x12000, scoped, tag = 'internal scratch']
  %s0 = inlined_call_operand.vmem [shape: f32[2,4,256], index: 0, kind: input, shape index: {}]
  %s1 = inlined_call_operand.vmem [shape: f32[24,4], index: 1, kind: input, shape index: {}]
  %s2 = inlined_call_operand.vmem [shape: f32[24,1], index: 2, kind: input, shape index: {}]
  %s3 = inlined_call_operand.hbm [shape: f32[2,8,256], index: 3, kind: output, shape index: {}]
  %s4 = sld [smem:[#allocation0]]
  $region45: #{tpu_custom_call.1} parent=0
    _
  %s6 = ssub.s32 1, %s4
  %s7 = scalar_select 0, %s6, %s4
  $region1: #{tpu_custom_call.1} parent=0
    #allocation2 [shape = 'u8[16384]{0}', space=vmem, size = 0x4000, scoped, tag = 'output window, operand 0']
    #allocation3 [shape = 's32[2]{0}', space=sflag, size = 0x8, scoped, tag = 'scoped memory for tpu_custom_call.1']
    %8 = vsyncpa [#allocation3], 0
    %s9 = scalar_lea.sflag [#allocation3], 1
    %10 = vsyncpa %s9, 0
    loop: start=0, step=1, limit=4
    $region2: #{tpu_custom_call.1} parent=1 // loop_pre_header
      _
    $region3: #{tpu_custom_call.1} parent=1 // loop_header
      %s12 = sphi 0, %s16
      %p13 = scmp.ge.s32.totalorder %s12, 4
      %s19 = sphi 0, %s31
      %s20 = sphi 0, %s27
      %s21 = sphi 0, %s19
      %s22 = sphi 0, %s20
      %s23 = sphi 0, %s21
      %s24 = sphi 0, %s22
      %s36 = sphi 0, %s38
      %s39 = sphi 0, %s36
      %s40 = sphi 0, %s39
      %s56 = sphi 0, %s40
      %s60 = sphi 0, %s60
      %s62 = sphi 0, %s60
      %s63 = sphi 0, %s62
      %s77 = sphi 0, %s63
      %s81 = sphi 0, %s81
      %s83 = sphi 0, %s81
      %s84 = sphi 0, %s83
      %s98 = sphi 0, %s84
      %s106 = sphi 0, %s108
      %s109 = sphi 0, %s106
      %s110 = sphi 0, %s109
      %s126 = sphi 0, %s110
    $region4: #{tpu_custom_call.1} parent=1 // loop_header_branch
      %15 = sbr.rel (%p13) target = $region8
    $region5: #{tpu_custom_call.1} parent=1 // loop_body
      %s17 = ssub.s32 %s12, 1
      %s18 = ssub.s32 %s12, 2
      %s25 = sadd.s32 1, %s20
      %p26 = scmp.ge.s32.totalorder %s25, 1
      %s27 = scalar_select %p26, 0, %s25
      %s28 = sadd.s32 1, %s19
      %s29 = scalar_select %p26, %s28, %s19
      %p30 = scmp.ge.s32.totalorder %s29, 2
      %s31 = scalar_select %p30, 0, %s29
      %s32 = ssub.s32 %s19, %s31
      %s33 = ssub.s32 %s20, %s27
      %s34 = sor.u32 %s32, %s33
      %p35 = scmp.eq.s32.totalorder %s34, 0
      %s37 = sadd.s32 %s36, 1
      %s38 = scalar_select %p35, %s36, %s37
      %p41 = pneg %p35
      %p42 = scmp.eq.s32.totalorder %s12, 1
      %p43 = por %p41, %p42
      %p44 = scmp.ne.s32.totalorder %s36, %s39
      %p45 = scmp.eq.s32.totalorder %s12, 0
      %p46 = por %p44, %p45
      %p47 = scmp.ne.s32.totalorder %s36, %s39
      %p48 = scmp.eq.s32.totalorder %s17, 1
      %p49 = por %p47, %p48
      %p50 = scmp.ne.s32.totalorder %s39, %s40
      %p51 = scmp.eq.s32.totalorder %s17, 0
      %p52 = por %p50, %p51
      %p53 = scmp.ne.s32.totalorder %s39, %s40
      %p54 = scmp.eq.s32.totalorder %s18, 1
      %p55 = por %p53, %p54
      %p57 = scmp.ne.s32.totalorder %s40, %s56
      %p58 = scmp.eq.s32.totalorder %s18, 0
      %p59 = por %p57, %p58
      %s61 = sadd.s32 %s60, 1
      %p64 = scmp.eq.s32.totalorder %s12, 1
      %p65 = scmp.ne.s32.totalorder %s60, %s62
      %p66 = scmp.eq.s32.totalorder %s12, 0
      %p67 = por %p65, %p66
      %p68 = scmp.ne.s32.totalorder %s60, %s62
      %p69 = scmp.eq.s32.totalorder %s17, 1
      %p70 = por %p68, %p69
      %p71 = scmp.ne.s32.totalorder %s62, %s63
      %p72 = scmp.eq.s32.totalorder %s17, 0
      %p73 = por %p71, %p72
      %p74 = scmp.ne.s32.totalorder %s62, %s63
      %p75 = scmp.eq.s32.totalorder %s18, 1
      %p76 = por %p74, %p75
      %p78 = scmp.ne.s32.totalorder %s63, %s77
      %p79 = scmp.eq.s32.totalorder %s18, 0
      %p80 = por %p78, %p79
      %s82 = sadd.s32 %s81, 1
      %p85 = scmp.eq.s32.totalorder %s12, 1
      %p86 = scmp.ne.s32.totalorder %s81, %s83
      %p87 = scmp.eq.s32.totalorder %s12, 0
      %p88 = por %p86, %p87
      %p89 = scmp.ne.s32.totalorder %s81, %s83
      %p90 = scmp.eq.s32.totalorder %s17, 1
      %p91 = por %p89, %p90
      %p92 = scmp.ne.s32.totalorder %s83, %s84
      %p93 = scmp.eq.s32.totalorder %s17, 0
      %p94 = por %p92, %p93
      %p95 = scmp.ne.s32.totalorder %s83, %s84
      %p96 = scmp.eq.s32.totalorder %s18, 1
      %p97 = por %p95, %p96
      %p99 = scmp.ne.s32.totalorder %s84, %s98
      %p100 = scmp.eq.s32.totalorder %s18, 0
      %p101 = por %p99, %p100
      %s102 = ssub.s32 %s19, %s31
      %s103 = ssub.s32 %s20, %s27
      %s104 = sor.u32 %s102, %s103
      %p105 = scmp.eq.s32.totalorder %s104, 0
      %s107 = sadd.s32 %s106, 1
      %s108 = scalar_select %p105, %s106, %s107
      %p111 = pneg %p105
      %p112 = scmp.eq.s32.totalorder %s12, 1
      %p113 = por %p111, %p112
      %p114 = scmp.ne.s32.totalorder %s106, %s109
      %p115 = scmp.eq.s32.totalorder %s12, 0
      %p116 = por %p114, %p115
      %p117 = scmp.ne.s32.totalorder %s106, %s109
      %p118 = scmp.eq.s32.totalorder %s17, 1
      %p119 = por %p117, %p118
      %p120 = scmp.ne.s32.totalorder %s109, %s110
      %p121 = scmp.eq.s32.totalorder %s17, 0
      %p122 = por %p120, %p121
      %p123 = scmp.ne.s32.totalorder %s109, %s110
      %p124 = scmp.eq.s32.totalorder %s18, 1
      %p125 = por %p123, %p124
      %p127 = scmp.ne.s32.totalorder %s110, %s126
      %p128 = scmp.eq.s32.totalorder %s18, 0
      %p129 = por %p127, %p128
      %p130 = scmp.le.s32.totalorder 1, %s12
      %p131 = scmp.lt.s32.totalorder %s12, 3
      %p132 = pnand %p130, %p131
      %p133 = pneg %p132
      // Predicated region
      $region9: #{tpu_custom_call.1} parent=5 // pred_check
        _
      $region10: #{tpu_custom_call.1} parent=5 // pred_check_branch
        %135 = sbr.rel (%p132) target = $region12
      $region11: #{tpu_custom_call.1} parent=5 // pred_region
        %s136 = ssub.s32 %s12, 1
        // Predicated region
        $region13: #{tpu_custom_call.1} parent=11 // pred_check
          %p137 = pneg %p73
        $region14: #{tpu_custom_call.1} parent=11 // pred_check_branch
          %139 = sbr.rel (%p137) target = $region16
        $region15: #{tpu_custom_call.1} parent=11 // pred_region
          _
        $region16: #{tpu_custom_call.1} parent=11 // pred_fallthru
          _
        // Predicated region
        $region17: #{tpu_custom_call.1} parent=11 // pred_check
          %p140 = pneg %p94
        $region18: #{tpu_custom_call.1} parent=11 // pred_check_branch
          %142 = sbr.rel (%p140) target = $region20
        $region19: #{tpu_custom_call.1} parent=11 // pred_region
          _
        $region20: #{tpu_custom_call.1} parent=11 // pred_fallthru
          _
      $region12: #{tpu_custom_call.1} parent=5 // pred_fallthru
        _
      %p143 = scmp.lt.s32.totalorder %s12, 2
      // Predicated region
      $region21: #{tpu_custom_call.1} parent=5 // pred_check
        %p144 = pneg %p143
      $region22: #{tpu_custom_call.1} parent=5 // pred_check_branch
        %146 = sbr.rel (%p144) target = $region24
      $region23: #{tpu_custom_call.1} parent=5 // pred_region
        // Predicated region
        $region25: #{tpu_custom_call.1} parent=23 // pred_check
          %p147 = pneg %p46
        $region26: #{tpu_custom_call.1} parent=23 // pred_check_branch
          %149 = sbr.rel (%p147) target = $region28
        $region27: #{tpu_custom_call.1} parent=23 // pred_region
          %s150 = smul.u32 2, %s20
          %p151 = scmp.lt.s32.totalorder %s19, 1
          %s152 = scalar_select %p151, %s19, 1
          %p153 = scmp.lt.s32.totalorder %s150, 1
          %s154 = scalar_select %p153, %s150, 1
          %s155 = smul.addr %s152, 2
          %s156 = sadd.s32 %s154, %s155
          %s157 = smul.addr %s156, 4
          %s158 = scalar_lea.vmem %s0, %s157
          %s159 = smul.u32 2, %s20
        $region28: #{tpu_custom_call.1} parent=23 // pred_fallthru
          _
      $region24: #{tpu_custom_call.1} parent=5 // pred_fallthru
        _
      %p160 = scmp.le.s32.totalorder 1, %s12
      %p161 = scmp.lt.s32.totalorder %s12, 3
      %p162 = pnand %p160, %p161
      %p163 = pneg %p162
      // Predicated region
      $region29: #{tpu_custom_call.1} parent=5 // pred_check
        _
      $region30: #{tpu_custom_call.1} parent=5 // pred_check_branch
        %165 = sbr.rel (%p162) target = $region32
      $region31: #{tpu_custom_call.1} parent=5 // pred_region
        %s166 = ssub.s32 %s12, 1
        %s167 = smul.u32 2, %s22
        %p168 = scmp.lt.s32.totalorder %s21, 1
        %s169 = scalar_select %p168, %s21, 1
        %p170 = scmp.lt.s32.totalorder %s167, 1
        %s171 = scalar_select %p170, %s167, 1
        %s172 = smul.addr %s169, 2
        %s173 = sadd.s32 %s171, %s172
        %s174 = smul.addr %s173, 4
        %s175 = scalar_lea.vmem %s0, %s174
        %p176 = pneg %p52
        %p177 = pneg %p49
        %p178 = pneg %p73
        %p179 = pneg %p70
        %p180 = pneg %p94
        %p181 = pneg %p91
        %p182 = pneg %p122
        %p183 = pneg %p119
        %s184 = sand.u32 %s109, 1
        %s185 = scalar_lea.sflag [#allocation3], %s184
        %s186 = sand.u32 %s109, 1
        %s187 = smul.addr %s186, 16
        %s188 = scalar_lea.vmem [#allocation2], %s187
        %s189 = smul.u32 2, %s22
        %p190 = scmp.lt.s32.totalorder %s21, 1
        %s191 = scalar_select %p190, %s21, 1
        %p192 = scmp.lt.s32.totalorder %s189, 1
        %s193 = scalar_select %p192, %s189, 1
        %s194 = smul.addr %s191, 2
        %s195 = sadd.s32 %s193, %s194
        %s196 = smul.addr %s195, 4
        %s197 = scalar_lea.vmem %s0, %s196
        %s198 = smul.u32 2, %s22
        %s199 = smul.u32 2, %s22
        %v200 = vld [vmem:[%s1] sm:$0xff]
        %v201 = vld [vmem:[%s1 + $0x8] sm:$0xff]
        %v202 = vld [vmem:[%s1 + $0x10] sm:$0xff]
        %v203 = vld [vmem:[%s197] sm:$0xff]
        %v204 = vld [vmem:[%s2] sm:$0xff]
        %v205 = vld [vmem:[%s2 + $0x8] sm:$0xff]
        %v206 = vld [vmem:[%s2 + $0x10] sm:$0xff]
        %208 = vset.pattern.permute.xlu0 0
        %209 = vperm.xlu0 %208, %v204
        %v210 = vpop.permute.xlu0 %209
        %213 = vset.pattern.permute.xlu0 0
        %214 = vperm.xlu0 %213, %v205
        %v215 = vpop.permute.xlu0 %214
        %218 = vset.pattern.permute.xlu0 0
        %219 = vperm.xlu0 %218, %v206
        %v220 = vpop.permute.xlu0 %219
        %v223 = vcombine.high %v203, %v203
        %vm224 = vcmask 31744
        %v226 = vsel %vm224, %v200, 0
        %v229 = vsel %vm224, %v201, 0
        %v232 = vsel %vm224, %v202, 0
        %vm234 = vcmask 1043456
        %v235 = vsel %vm234, %v203, 0
        %v237 = vsel %vm234, %v223, 0
        %v239 = vand.u32 %v237, 4294901760
        %240 = vmatprep.subr.mxu0 %v239
        %v241 = vand.u32 %v235, 4294901760
        %242 = vmatpush1.msra.mxu0 %v241
        %243 = vmatprep.subr.mxu0 0.0
        %244 = vmatpush1.msra.mxu0 0.0
        %245 = vmatprep.subr.mxu0 0.0
        %246 = vmatpush1.msra.mxu0 0.0
        %247 = vmatprep.subr.mxu0 0.0
        %248 = vmatpush1.msra.mxu0 0.0
        %249 = vmatprep.subr.mxu0 0.0
        %250 = vmatpush1.msra.mxu0 0.0
        %251 = vmatprep.subr.mxu0 0.0
        %252 = vmatpush1.msra.mxu0 0.0
        %253 = vmatprep.subr.mxu0 0.0
        %254 = vmatpush1.msra.mxu0 0.0
        %255 = vmatprep.subr.mxu0 0.0
        %256 = vmatpush1.msra.mxu0 0.0
        %257 = vmatprep.subr.mxu0 0.0
        %258 = vmatpush1.msra.mxu0 0.0
        %259 = vmatprep.subr.mxu0 0.0
        %260 = vmatpush1.msra.mxu0 0.0
        %261 = vmatprep.subr.mxu0 0.0
        %262 = vmatpush1.msra.mxu0 0.0
        %263 = vmatprep.subr.mxu0 0.0
        %264 = vmatpush1.msra.mxu0 0.0
        %265 = vmatprep.subr.mxu0 0.0
        %266 = vmatpush1.msra.mxu0 0.0
        %267 = vmatprep.subr.mxu0 0.0
        %268 = vmatpush1.msra.mxu0 0.0
        %269 = vmatprep.subr.mxu0 0.0
        %270 = vmatpush1.msra.mxu0 0.0
        %271 = vmatprep.subr.mxu0 0.0
        %272 = vmatpush1.msra.mxu0 0.0
        %273 = vmatprep.subr.mxu0 0.0
        %274 = vmatpush1.msra.mxu0 0.0
        %275 = vmatprep.subr.mxu0 0.0
        %276 = vmatpush1.msra.mxu0 0.0
        %277 = vmatprep.subr.mxu0 0.0
        %278 = vmatpush1.msra.mxu0 0.0
        %279 = vmatprep.subr.mxu0 0.0
        %280 = vmatpush1.msra.mxu0 0.0
        %281 = vmatprep.subr.mxu0 0.0
        %282 = vmatpush1.msra.mxu0 0.0
        %283 = vmatprep.subr.mxu0 0.0
        %284 = vmatpush1.msra.mxu0 0.0
        %285 = vmatprep.subr.mxu0 0.0
        %286 = vmatpush1.msra.mxu0 0.0
        %287 = vmatprep.subr.mxu0 0.0
        %288 = vmatpush1.msra.mxu0 0.0
        %289 = vmatprep.subr.mxu0 0.0
        %290 = vmatpush1.msra.mxu0 0.0
        %291 = vmatprep.subr.mxu0 0.0
        %292 = vmatpush1.msra.mxu0 0.0
        %293 = vmatprep.subr.mxu0 0.0
        %294 = vmatpush1.msra.mxu0 0.0
        %295 = vmatprep.subr.mxu0 0.0
        %296 = vmatpush1.msra.mxu0 0.0
        %297 = vmatprep.subr.mxu0 0.0
        %298 = vmatpush1.msra.mxu0 0.0
        %299 = vmatprep.subr.mxu0 0.0
        %300 = vmatpush1.msra.mxu0 0.0
        %301 = vmatprep.subr.mxu0 0.0
        %302 = vmatpush1.msra.mxu0 0.0
        %303 = vmatprep.subr.mxu0 0.0
        %304 = vmatpush1.msra.mxu0 0.0
        %305 = vmatprep.mubr.f32.mxu0 0.0
        %v306 = vand.u32 %v226, 4294901760
        %v307 = vsub.f32 %v226, %v306
        %v308 = vand.u32 %v307, 4294901760
        %v309 = vsub.f32 %v307, %v308
        %v310 = vand.u32 %v309, 4294901760
        %311 = vmatmul.mubr.f32.gmra.mrb[0].mxu0 %v310
        %v312 = vpop.f32.mrb[0].mxu0
        %v313 = vadd.f32 %v210, %v312
        %v314 = vpop.f32.mrb[0].mxu0
        %v315 = vadd.f32 %v210, %v314
        %316 = vmatprep.mubr.f32.mxu0 0.0
        %v317 = vand.u32 %v229, 4294901760
        %v318 = vsub.f32 %v229, %v317
        %v319 = vand.u32 %v318, 4294901760
        %v320 = vsub.f32 %v318, %v319
        %v321 = vand.u32 %v320, 4294901760
        %322 = vmatmul.mubr.f32.gmra.mrb[0].mxu0 %v321
        %v323 = vpop.f32.mrb[0].mxu0
        %v324 = vadd.f32 %v215, %v323
        %v325 = vpop.f32.mrb[0].mxu0
        %v326 = vadd.f32 %v215, %v325
        %327 = vmatprep.mubr.f32.mxu0 0.0
        %v328 = vand.u32 %v232, 4294901760
        %v329 = vsub.f32 %v232, %v328
        %v330 = vand.u32 %v329, 4294901760
        %v331 = vsub.f32 %v329, %v330
        %v332 = vand.u32 %v331, 4294901760
        %333 = vmatmul.mubr.f32.gmra.mrb[0].mxu0 %v332
        %v334 = vpop.f32.mrb[0].mxu0
        %v335 = vadd.f32 %v220, %v334
        %v336 = vpop.f32.mrb[0].mxu0
        %v337 = vadd.f32 %v220, %v336
        %338 = vdwg.mxu0
        %v339 = vand.u32 %v237, 4294901760
        %v340 = vsub.f32 %v237, %v339
        %v341 = vand.u32 %v340, 4294901760
        %v342 = vsub.f32 %v340, %v341
        %v343 = vand.u32 %v342, 4294901760
        %344 = vmatprep.subr.mxu0 %v343
        %v345 = vand.u32 %v235, 4294901760
        %v346 = vsub.f32 %v235, %v345
        %v347 = vand.u32 %v346, 4294901760
        %v348 = vsub.f32 %v346, %v347
        %v349 = vand.u32 %v348, 4294901760
        %350 = vmatpush1.msra.mxu0 %v349
        %351 = vmatprep.subr.mxu0 0.0
        %352 = vmatpush1.msra.mxu0 0.0
        %353 = vmatprep.subr.mxu0 0.0
        %354 = vmatpush1.msra.mxu0 0.0
        %355 = vmatprep.subr.mxu0 0.0
        %356 = vmatpush1.msra.mxu0 0.0
        %357 = vmatprep.subr.mxu0 0.0
        %358 = vmatpush1.msra.mxu0 0.0
        %359 = vmatprep.subr.mxu0 0.0
        %360 = vmatpush1.msra.mxu0 0.0
        %361 = vmatprep.subr.mxu0 0.0
        %362 = vmatpush1.msra.mxu0 0.0
        %363 = vmatprep.subr.mxu0 0.0
        %364 = vmatpush1.msra.mxu0 0.0
        %365 = vmatprep.subr.mxu0 0.0
        %366 = vmatpush1.msra.mxu0 0.0
        %367 = vmatprep.subr.mxu0 0.0
        %368 = vmatpush1.msra.mxu0 0.0
        %369 = vmatprep.subr.mxu0 0.0
        %370 = vmatpush1.msra.mxu0 0.0
        %371 = vmatprep.subr.mxu0 0.0
        %372 = vmatpush1.msra.mxu0 0.0
        %373 = vmatprep.subr.mxu0 0.0
        %374 = vmatpush1.msra.mxu0 0.0
        %375 = vmatprep.subr.mxu0 0.0
        %376 = vmatpush1.msra.mxu0 0.0
        %377 = vmatprep.subr.mxu0 0.0
        %378 = vmatpush1.msra.mxu0 0.0
        %379 = vmatprep.subr.mxu0 0.0
        %380 = vmatpush1.msra.mxu0 0.0
        %381 = vmatprep.subr.mxu0 0.0
        %382 = vmatpush1.msra.mxu0 0.0
        %383 = vmatprep.subr.mxu0 0.0
        %384 = vmatpush1.msra.mxu0 0.0
        %385 = vmatprep.subr.mxu0 0.0
        %386 = vmatpush1.msra.mxu0 0.0
        %387 = vmatprep.subr.mxu0 0.0
        %388 = vmatpush1.msra.mxu0 0.0
        %389 = vmatprep.subr.mxu0 0.0
        %390 = vmatpush1.msra.mxu0 0.0
        %391 = vmatprep.subr.mxu0 0.0
        %392 = vmatpush1.msra.mxu0 0.0
        %393 = vmatprep.subr.mxu0 0.0
        %394 = vmatpush1.msra.mxu0 0.0
        %395 = vmatprep.subr.mxu0 0.0
        %396 = vmatpush1.msra.mxu0 0.0
        %397 = vmatprep.subr.mxu0 0.0
        %398 = vmatpush1.msra.mxu0 0.0
        %399 = vmatprep.subr.mxu0 0.0
        %400 = vmatpush1.msra.mxu0 0.0
        %401 = vmatprep.subr.mxu0 0.0
        %402 = vmatpush1.msra.mxu0 0.0
        %403 = vmatprep.subr.mxu0 0.0
        %404 = vmatpush1.msra.mxu0 0.0
        %405 = vmatprep.subr.mxu0 0.0
        %406 = vmatpush1.msra.mxu0 0.0
        %407 = vmatprep.subr.mxu0 0.0
        %408 = vmatpush1.msra.mxu0 0.0
        %409 = vmatprep.subr.mxu0 0.0
        %410 = vmatpush1.msra.mxu0 0.0
        %411 = vmatprep.subr.mxu0 0.0
        %412 = vmatpush1.msra.mxu0 0.0
        %413 = vmatprep.mubr.f32.mxu0 0.0
        %v414 = vand.u32 %v226, 4294901760
        %415 = vmatmul.mubr.f32.gmra.mrb[0].mxu0 %v414
        %v416 = vpop.f32.mrb[0].mxu0
        %v417 = vadd.f32 %v313, %v416
        %v418 = vpop.f32.mrb[0].mxu0
        %v419 = vadd.f32 %v315, %v418
        %420 = vmatprep.mubr.f32.mxu0 0.0
        %v421 = vand.u32 %v229, 4294901760
        %422 = vmatmul.mubr.f32.gmra.mrb[0].mxu0 %v421
        %v423 = vpop.f32.mrb[0].mxu0
        %v424 = vadd.f32 %v324, %v423
        %v425 = vpop.f32.mrb[0].mxu0
        %v426 = vadd.f32 %v326, %v425
        %427 = vmatprep.mubr.f32.mxu0 0.0
        %v428 = vand.u32 %v232, 4294901760
        %429 = vmatmul.mubr.f32.gmra.mrb[0].mxu0 %v428
        %v430 = vpop.f32.mrb[0].mxu0
        %v431 = vadd.f32 %v335, %v430
        %v432 = vpop.f32.mrb[0].mxu0
        %v433 = vadd.f32 %v337, %v432
        %434 = vdwg.mxu0
        %v435 = vand.u32 %v237, 4294901760
        %v436 = vsub.f32 %v237, %v435
        %437 = vmatprep.subr.mxu0 %v436
        %v438 = vand.u32 %v235, 4294901760
        %v439 = vsub.f32 %v235, %v438
        %440 = vmatpush1.msra.mxu0 %v439
        %441 = vmatprep.subr.mxu0 0.0
        %442 = vmatpush1.msra.mxu0 0.0
        %443 = vmatprep.subr.mxu0 0.0
        %444 = vmatpush1.msra.mxu0 0.0
        %445 = vmatprep.subr.mxu0 0.0
        %446 = vmatpush1.msra.mxu0 0.0
        %447 = vmatprep.subr.mxu0 0.0
        %448 = vmatpush1.msra.mxu0 0.0
        %449 = vmatprep.subr.mxu0 0.0
        %450 = vmatpush1.msra.mxu0 0.0
        %451 = vmatprep.subr.mxu0 0.0
        %452 = vmatpush1.msra.mxu0 0.0
        %453 = vmatprep.subr.mxu0 0.0
        %454 = vmatpush1.msra.mxu0 0.0
        %455 = vmatprep.subr.mxu0 0.0
        %456 = vmatpush1.msra.mxu0 0.0
        %457 = vmatprep.subr.mxu0 0.0
        %458 = vmatpush1.msra.mxu0 0.0
        %459 = vmatprep.subr.mxu0 0.0
        %460 = vmatpush1.msra.mxu0 0.0
        %461 = vmatprep.subr.mxu0 0.0
        %462 = vmatpush1.msra.mxu0 0.0
        %463 = vmatprep.subr.mxu0 0.0
        %464 = vmatpush1.msra.mxu0 0.0
        %465 = vmatprep.subr.mxu0 0.0
        %466 = vmatpush1.msra.mxu0 0.0
        %467 = vmatprep.subr.mxu0 0.0
        %468 = vmatpush1.msra.mxu0 0.0
        %469 = vmatprep.subr.mxu0 0.0
        %470 = vmatpush1.msra.mxu0 0.0
        %471 = vmatprep.subr.mxu0 0.0
        %472 = vmatpush1.msra.mxu0 0.0
        %473 = vmatprep.subr.mxu0 0.0
        %474 = vmatpush1.msra.mxu0 0.0
        %475 = vmatprep.subr.mxu0 0.0
        %476 = vmatpush1.msra.mxu0 0.0
        %477 = vmatprep.subr.mxu0 0.0
        %478 = vmatpush1.msra.mxu0 0.0
        %479 = vmatprep.subr.mxu0 0.0
        %480 = vmatpush1.msra.mxu0 0.0
        %481 = vmatprep.subr.mxu0 0.0
        %482 = vmatpush1.msra.mxu0 0.0
        %483 = vmatprep.subr.mxu0 0.0
        %484 = vmatpush1.msra.mxu0 0.0
        %485 = vmatprep.subr.mxu0 0.0
        %486 = vmatpush1.msra.mxu0 0.0
        %487 = vmatprep.subr.mxu0 0.0
        %488 = vmatpush1.msra.mxu0 0.0
        %489 = vmatprep.subr.mxu0 0.0
        %490 = vmatpush1.msra.mxu0 0.0
        %491 = vmatprep.subr.mxu0 0.0
        %492 = vmatpush1.msra.mxu0 0.0
        %493 = vmatprep.subr.mxu0 0.0
        %494 = vmatpush1.msra.mxu0 0.0
        %495 = vmatprep.subr.mxu0 0.0
        %496 = vmatpush1.msra.mxu0 0.0
        %497 = vmatprep.subr.mxu0 0.0
        %498 = vmatpush1.msra.mxu0 0.0
        %499 = vmatprep.subr.mxu0 0.0
        %500 = vmatpush1.msra.mxu0 0.0
        %501 = vmatprep.subr.mxu0 0.0
        %502 = vmatpush1.msra.mxu0 0.0
        %503 = vmatprep.mubr.f32.mxu0 0.0
        %v504 = vand.u32 %v226, 4294901760
        %v505 = vsub.f32 %v226, %v504
        %506 = vmatmul.mubr.f32.gmra.mrb[0].mxu0 %v505
        %v507 = vpop.f32.mrb[0].mxu0
        %v508 = vadd.f32 %v417, %v507
        %v509 = vpop.f32.mrb[0].mxu0
        %v510 = vadd.f32 %v419, %v509
        %511 = vmatprep.mubr.f32.mxu0 0.0
        %v512 = vand.u32 %v229, 4294901760
        %v513 = vsub.f32 %v229, %v512
        %514 = vmatmul.mubr.f32.gmra.mrb[0].mxu0 %v513
        %v515 = vpop.f32.mrb[0].mxu0
        %v516 = vadd.f32 %v424, %v515
        %v517 = vpop.f32.mrb[0].mxu0
        %v518 = vadd.f32 %v426, %v517
        %519 = vmatprep.mubr.f32.mxu0 0.0
        %v520 = vand.u32 %v232, 4294901760
        %v521 = vsub.f32 %v232, %v520
        %522 = vmatmul.mubr.f32.gmra.mrb[0].mxu0 %v521
        %v523 = vpop.f32.mrb[0].mxu0
        %v524 = vadd.f32 %v431, %v523
        %v525 = vpop.f32.mrb[0].mxu0
        %v526 = vadd.f32 %v433, %v525
        %527 = vdwg.mxu0
        %v528 = vand.u32 %v237, 4294901760
        %529 = vmatprep.subr.mxu0 %v528
        %v530 = vand.u32 %v235, 4294901760
        %531 = vmatpush1.msra.mxu0 %v530
        %532 = vmatprep.subr.mxu0 0.0
        %533 = vmatpush1.msra.mxu0 0.0
        %534 = vmatprep.subr.mxu0 0.0
        %535 = vmatpush1.msra.mxu0 0.0
        %536 = vmatprep.subr.mxu0 0.0
        %537 = vmatpush1.msra.mxu0 0.0
        %538 = vmatprep.subr.mxu0 0.0
        %539 = vmatpush1.msra.mxu0 0.0
        %540 = vmatprep.subr.mxu0 0.0
        %541 = vmatpush1.msra.mxu0 0.0
        %542 = vmatprep.subr.mxu0 0.0
        %543 = vmatpush1.msra.mxu0 0.0
        %544 = vmatprep.subr.mxu0 0.0
        %545 = vmatpush1.msra.mxu0 0.0
        %546 = vmatprep.subr.mxu0 0.0
        %547 = vmatpush1.msra.mxu0 0.0
        %548 = vmatprep.subr.mxu0 0.0
        %549 = vmatpush1.msra.mxu0 0.0
        %550 = vmatprep.subr.mxu0 0.0
        %551 = vmatpush1.msra.mxu0 0.0
        %552 = vmatprep.subr.mxu0 0.0
        %553 = vmatpush1.msra.mxu0 0.0
        %554 = vmatprep.subr.mxu0 0.0
        %555 = vmatpush1.msra.mxu0 0.0
        %556 = vmatprep.subr.mxu0 0.0
        %557 = vmatpush1.msra.mxu0 0.0
        %558 = vmatprep.subr.mxu0 0.0
        %559 = vmatpush1.msra.mxu0 0.0
        %560 = vmatprep.subr.mxu0 0.0
        %561 = vmatpush1.msra.mxu0 0.0
        %562 = vmatprep.subr.mxu0 0.0
        %563 = vmatpush1.msra.mxu0 0.0
        %564 = vmatprep.subr.mxu0 0.0
        %565 = vmatpush1.msra.mxu0 0.0
        %566 = vmatprep.subr.mxu0 0.0
        %567 = vmatpush1.msra.mxu0 0.0
        %568 = vmatprep.subr.mxu0 0.0
        %569 = vmatpush1.msra.mxu0 0.0
        %570 = vmatprep.subr.mxu0 0.0
        %571 = vmatpush1.msra.mxu0 0.0
        %572 = vmatprep.subr.mxu0 0.0
        %573 = vmatpush1.msra.mxu0 0.0
        %574 = vmatprep.subr.mxu0 0.0
        %575 = vmatpush1.msra.mxu0 0.0
        %576 = vmatprep.subr.mxu0 0.0
        %577 = vmatpush1.msra.mxu0 0.0
        %578 = vmatprep.subr.mxu0 0.0
        %579 = vmatpush1.msra.mxu0 0.0
        %580 = vmatprep.subr.mxu0 0.0
        %581 = vmatpush1.msra.mxu0 0.0
        %582 = vmatprep.subr.mxu0 0.0
        %583 = vmatpush1.msra.mxu0 0.0
        %584 = vmatprep.subr.mxu0 0.0
        %585 = vmatpush1.msra.mxu0 0.0
        %586 = vmatprep.subr.mxu0 0.0
        %587 = vmatpush1.msra.mxu0 0.0
        %588 = vmatprep.subr.mxu0 0.0
        %589 = vmatpush1.msra.mxu0 0.0
        %590 = vmatprep.subr.mxu0 0.0
        %591 = vmatpush1.msra.mxu0 0.0
        %592 = vmatprep.subr.mxu0 0.0
        %593 = vmatpush1.msra.mxu0 0.0
        %594 = vmatprep.mubr.f32.mxu0 0.0
        %v595 = vand.u32 %v226, 4294901760
        %v596 = vsub.f32 %v226, %v595
        %v597 = vand.u32 %v596, 4294901760
        %598 = vmatmul.mubr.f32.gmra.mrb[0].mxu0 %v597
        %v599 = vpop.f32.mrb[0].mxu0
        %v600 = vadd.f32 %v508, %v599
        %v601 = vpop.f32.mrb[0].mxu0
        %v602 = vadd.f32 %v510, %v601
        %603 = vmatprep.mubr.f32.mxu0 0.0
        %v604 = vand.u32 %v229, 4294901760
        %v605 = vsub.f32 %v229, %v604
        %v606 = vand.u32 %v605, 4294901760
        %607 = vmatmul.mubr.f32.gmra.mrb[0].mxu0 %v606
        %v608 = vpop.f32.mrb[0].mxu0
        %v609 = vadd.f32 %v516, %v608
        %v610 = vpop.f32.mrb[0].mxu0
        %v611 = vadd.f32 %v518, %v610
        %612 = vmatprep.mubr.f32.mxu0 0.0
        %v613 = vand.u32 %v232, 4294901760
        %v614 = vsub.f32 %v232, %v613
        %v615 = vand.u32 %v614, 4294901760
        %616 = vmatmul.mubr.f32.gmra.mrb[0].mxu0 %v615
        %v617 = vpop.f32.mrb[0].mxu0
        %v618 = vadd.f32 %v524, %v617
        %v619 = vpop.f32.mrb[0].mxu0
        %v620 = vadd.f32 %v526, %v619
        %621 = vdwg.mxu0
        %v622 = vand.u32 %v237, 4294901760
        %v623 = vsub.f32 %v237, %v622
        %v624 = vand.u32 %v623, 4294901760
        %625 = vmatprep.subr.mxu0 %v624
        %v626 = vand.u32 %v235, 4294901760
        %v627 = vsub.f32 %v235, %v626
        %v628 = vand.u32 %v627, 4294901760
        %629 = vmatpush1.msra.mxu0 %v628
        %630 = vmatprep.subr.mxu0 0.0
        %631 = vmatpush1.msra.mxu0 0.0
        %632 = vmatprep.subr.mxu0 0.0
        %633 = vmatpush1.msra.mxu0 0.0
        %634 = vmatprep.subr.mxu0 0.0
        %635 = vmatpush1.msra.mxu0 0.0
        %636 = vmatprep.subr.mxu0 0.0
        %637 = vmatpush1.msra.mxu0 0.0
        %638 = vmatprep.subr.mxu0 0.0
        %639 = vmatpush1.msra.mxu0 0.0
        %640 = vmatprep.subr.mxu0 0.0
        %641 = vmatpush1.msra.mxu0 0.0
        %642 = vmatprep.subr.mxu0 0.0
        %643 = vmatpush1.msra.mxu0 0.0
        %644 = vmatprep.subr.mxu0 0.0
        %645 = vmatpush1.msra.mxu0 0.0
        %646 = vmatprep.subr.mxu0 0.0
        %647 = vmatpush1.msra.mxu0 0.0
        %648 = vmatprep.subr.mxu0 0.0
        %649 = vmatpush1.msra.mxu0 0.0
        %650 = vmatprep.subr.mxu0 0.0
        %651 = vmatpush1.msra.mxu0 0.0
        %652 = vmatprep.subr.mxu0 0.0
        %653 = vmatpush1.msra.mxu0 0.0
        %654 = vmatprep.subr.mxu0 0.0
        %655 = vmatpush1.msra.mxu0 0.0
        %656 = vmatprep.subr.mxu0 0.0
        %657 = vmatpush1.msra.mxu0 0.0
        %658 = vmatprep.subr.mxu0 0.0
        %659 = vmatpush1.msra.mxu0 0.0
        %660 = vmatprep.subr.mxu0 0.0
        %661 = vmatpush1.msra.mxu0 0.0
        %662 = vmatprep.subr.mxu0 0.0
        %663 = vmatpush1.msra.mxu0 0.0
        %664 = vmatprep.subr.mxu0 0.0
        %665 = vmatpush1.msra.mxu0 0.0
        %666 = vmatprep.subr.mxu0 0.0
        %667 = vmatpush1.msra.mxu0 0.0
        %668 = vmatprep.subr.mxu0 0.0
        %669 = vmatpush1.msra.mxu0 0.0
        %670 = vmatprep.subr.mxu0 0.0
        %671 = vmatpush1.msra.mxu0 0.0
        %672 = vmatprep.subr.mxu0 0.0
        %673 = vmatpush1.msra.mxu0 0.0
        %674 = vmatprep.subr.mxu0 0.0
        %675 = vmatpush1.msra.mxu0 0.0
        %676 = vmatprep.subr.mxu0 0.0
        %677 = vmatpush1.msra.mxu0 0.0
        %678 = vmatprep.subr.mxu0 0.0
        %679 = vmatpush1.msra.mxu0 0.0
        %680 = vmatprep.subr.mxu0 0.0
        %681 = vmatpush1.msra.mxu0 0.0
        %682 = vmatprep.subr.mxu0 0.0
        %683 = vmatpush1.msra.mxu0 0.0
        %684 = vmatprep.subr.mxu0 0.0
        %685 = vmatpush1.msra.mxu0 0.0
        %686 = vmatprep.subr.mxu0 0.0
        %687 = vmatpush1.msra.mxu0 0.0
        %688 = vmatprep.subr.mxu0 0.0
        %689 = vmatpush1.msra.mxu0 0.0
        %690 = vmatprep.subr.mxu0 0.0
        %691 = vmatpush1.msra.mxu0 0.0
        %692 = vmatprep.mubr.f32.mxu0 0.0
        %v693 = vand.u32 %v226, 4294901760
        %694 = vmatmul.mubr.f32.gmra.mrb[0].mxu0 %v693
        %v695 = vpop.f32.mrb[0].mxu0
        %v696 = vadd.f32 %v600, %v695
        %v697 = vpop.f32.mrb[0].mxu0
        %v698 = vadd.f32 %v602, %v697
        %699 = vmatprep.mubr.f32.mxu0 0.0
        %v700 = vand.u32 %v229, 4294901760
        %701 = vmatmul.mubr.f32.gmra.mrb[0].mxu0 %v700
        %v702 = vpop.f32.mrb[0].mxu0
        %v703 = vadd.f32 %v609, %v702
        %v704 = vpop.f32.mrb[0].mxu0
        %v705 = vadd.f32 %v611, %v704
        %706 = vmatprep.mubr.f32.mxu0 0.0
        %v707 = vand.u32 %v232, 4294901760
        %708 = vmatmul.mubr.f32.gmra.mrb[0].mxu0 %v707
        %v709 = vpop.f32.mrb[0].mxu0
        %v710 = vadd.f32 %v618, %v709
        %v711 = vpop.f32.mrb[0].mxu0
        %v712 = vadd.f32 %v620, %v711
        %713 = vdwg.mxu0
        %v714 = vand.u32 %v237, 4294901760
        %715 = vmatprep.subr.mxu0 %v714
        %v716 = vand.u32 %v235, 4294901760
        %717 = vmatpush1.msra.mxu0 %v716
        %718 = vmatprep.subr.mxu0 0.0
        %719 = vmatpush1.msra.mxu0 0.0
        %720 = vmatprep.subr.mxu0 0.0
        %721 = vmatpush1.msra.mxu0 0.0
        %722 = vmatprep.subr.mxu0 0.0
        %723 = vmatpush1.msra.mxu0 0.0
        %724 = vmatprep.subr.mxu0 0.0
        %725 = vmatpush1.msra.mxu0 0.0
        %726 = vmatprep.subr.mxu0 0.0
        %727 = vmatpush1.msra.mxu0 0.0
        %728 = vmatprep.subr.mxu0 0.0
        %729 = vmatpush1.msra.mxu0 0.0
        %730 = vmatprep.subr.mxu0 0.0
        %731 = vmatpush1.msra.mxu0 0.0
        %732 = vmatprep.subr.mxu0 0.0
        %733 = vmatpush1.msra.mxu0 0.0
        %734 = vmatprep.subr.mxu0 0.0
        %735 = vmatpush1.msra.mxu0 0.0
        %736 = vmatprep.subr.mxu0 0.0
        %737 = vmatpush1.msra.mxu0 0.0
        %738 = vmatprep.subr.mxu0 0.0
        %739 = vmatpush1.msra.mxu0 0.0
        %740 = vmatprep.subr.mxu0 0.0
        %741 = vmatpush1.msra.mxu0 0.0
        %742 = vmatprep.subr.mxu0 0.0
        %743 = vmatpush1.msra.mxu0 0.0
        %744 = vmatprep.subr.mxu0 0.0
        %745 = vmatpush1.msra.mxu0 0.0
        %746 = vmatprep.subr.mxu0 0.0
        %747 = vmatpush1.msra.mxu0 0.0
        %748 = vmatprep.subr.mxu0 0.0
        %749 = vmatpush1.msra.mxu0 0.0
        %750 = vmatprep.subr.mxu0 0.0
        %751 = vmatpush1.msra.mxu0 0.0
        %752 = vmatprep.subr.mxu0 0.0
        %753 = vmatpush1.msra.mxu0 0.0
        %754 = vmatprep.subr.mxu0 0.0
        %755 = vmatpush1.msra.mxu0 0.0
        %756 = vmatprep.subr.mxu0 0.0
        %757 = vmatpush1.msra.mxu0 0.0
        %758 = vmatprep.subr.mxu0 0.0
        %759 = vmatpush1.msra.mxu0 0.0
        %760 = vmatprep.subr.mxu0 0.0
        %761 = vmatpush1.msra.mxu0 0.0
        %762 = vmatprep.subr.mxu0 0.0
        %763 = vmatpush1.msra.mxu0 0.0
        %764 = vmatprep.subr.mxu0 0.0
        %765 = vmatpush1.msra.mxu0 0.0
        %766 = vmatprep.subr.mxu0 0.0
        %767 = vmatpush1.msra.mxu0 0.0
        %768 = vmatprep.subr.mxu0 0.0
        %769 = vmatpush1.msra.mxu0 0.0
        %770 = vmatprep.subr.mxu0 0.0
        %771 = vmatpush1.msra.mxu0 0.0
        %772 = vmatprep.subr.mxu0 0.0
        %773 = vmatpush1.msra.mxu0 0.0
        %774 = vmatprep.subr.mxu0 0.0
        %775 = vmatpush1.msra.mxu0 0.0
        %776 = vmatprep.subr.mxu0 0.0
        %777 = vmatpush1.msra.mxu0 0.0
        %778 = vmatprep.subr.mxu0 0.0
        %779 = vmatpush1.msra.mxu0 0.0
        %780 = vmatprep.mubr.f32.mxu0 0.0
        %v781 = vand.u32 %v226, 4294901760
        %782 = vmatmul.mubr.f32.gmra.mrb[0].mxu0 %v781
        %v783 = vpop.f32.mrb[0].mxu0
        %v784 = vadd.f32 %v696, %v783
        %v785 = vpop.f32.mrb[0].mxu0
        %v786 = vadd.f32 %v698, %v785
        %787 = vmatprep.mubr.f32.mxu0 0.0
        %v788 = vand.u32 %v229, 4294901760
        %789 = vmatmul.mubr.f32.gmra.mrb[0].mxu0 %v788
        %v790 = vpop.f32.mrb[0].mxu0
        %v791 = vadd.f32 %v703, %v790
        %v792 = vpop.f32.mrb[0].mxu0
        %v793 = vadd.f32 %v705, %v792
        %794 = vmatprep.mubr.f32.mxu0 0.0
        %v795 = vand.u32 %v232, 4294901760
        %796 = vmatmul.mubr.f32.gmra.mrb[0].mxu0 %v795
        %v797 = vpop.f32.mrb[0].mxu0
        %v798 = vadd.f32 %v710, %v797
        %v799 = vpop.f32.mrb[0].mxu0
        %v800 = vadd.f32 %v712, %v799
        %801 = vdwg.mxu0
        %v802 = vmax.f32 %v784, %v791
        %v803 = vmax.f32 %v786, %v793
        %v804 = vmax.f32 %v802, %v798
        %v805 = vmax.f32 %v803, %v800
        %v806 = vmax.f32 %v804, 0.0
        %v807 = vmax.f32 %v805, 0.0
        %808 = vst [vmem:[%s188] sm:$0xff] %v806
        %809 = vst [vmem:[%s188 + $0x8] sm:$0xff] %v807
        %s810 = sand.u32 %s109, 1
        %s811 = scalar_lea.sflag [#allocation3], %s810
        %s812 = sand.u32 %s109, 1
        %s813 = smul.addr %s812, 16
        %s814 = scalar_lea.vmem [#allocation2], %s813
        // Predicated region
        $region33: #{tpu_custom_call.1} parent=31 // pred_check
          %p815 = pneg %p119
        $region34: #{tpu_custom_call.1} parent=31 // pred_check_branch
          %817 = sbr.rel (%p815) target = $region36
        $region35: #{tpu_custom_call.1} parent=31 // pred_region
          %s818 = smul.u32 2, %s22
          %s820 = ssub.s32 256, 256
          %821 = vsyncadd %s811, %s820
          %s822 = smul.addr %s21, 2
          %s823 = sadd.s32 %s818, %s822
          %s824 = smul.addr %s823, 128
          %s825 = scalar_lea.hbm %s3, %s824
          %s827 = sshll.u32 %s814, 4
          %s828 = int_to_ptr.vmem [resolvable:$true] %s827
          %830 = dma.vmem_to_hbm [thread:$0]  %s828, 256, %s825, %s811
        $region36: #{tpu_custom_call.1} parent=31 // pred_fallthru
          _
      $region32: #{tpu_custom_call.1} parent=5 // pred_fallthru
        _
      %p831 = scmp.le.s32.totalorder 2, %s12
      // Predicated region
      $region37: #{tpu_custom_call.1} parent=5 // pred_check
        %p832 = pneg %p831
      $region38: #{tpu_custom_call.1} parent=5 // pred_check_branch
        %834 = sbr.rel (%p832) target = $region40
      $region39: #{tpu_custom_call.1} parent=5 // pred_region
        %s835 = ssub.s32 %s12, 2
        // Predicated region
        $region41: #{tpu_custom_call.1} parent=39 // pred_check
          %p836 = pneg %p125
        $region42: #{tpu_custom_call.1} parent=39 // pred_check_branch
          %838 = sbr.rel (%p836) target = $region44
        $region43: #{tpu_custom_call.1} parent=39 // pred_region
          %s839 = sand.u32 %s110, 1
          %s840 = scalar_lea.sflag [#allocation3], %s839
          %s841 = sand.u32 %s110, 1
          %s842 = smul.addr %s841, 16
          %s843 = scalar_lea.vmem [#allocation2], %s842
          %844 = dma.done %s840, 256
        $region44: #{tpu_custom_call.1} parent=39 // pred_fallthru
          _
      $region40: #{tpu_custom_call.1} parent=5 // pred_fallthru
        _
    $region6: #{tpu_custom_call.1} parent=1 // loop_footer
      %s16 = sadd.s32 1, %s12
    $region7: #{tpu_custom_call.1} parent=1 // loop_footer_branch
      %11 = sbr.rel target = $region3
    $region8: #{tpu_custom_call.1} parent=1 // loop_exit
      _
    %845 = vsyncpa [#allocation3], 1
    %s846 = scalar_lea.sflag [#allocation3], 1
    %847 = vsyncpa %s846, 1

</llo_original>
